<compile_context>
chip_gen: v7x
topology: tpu7x:2x2x1
jax: 0.10.0
libtpu: 0.0.40
codegen_flags: <defaults>
</compile_context>

<pallas_src>
import jax
import jax.numpy as jnp
from jax.experimental import pallas as pl
from jax.experimental.pallas import tpu as pltpu

_LANES = 128
# (1024, 128) f32 tile = 512 KiB per buffer; 2 inputs x 2 pipeline buffers =
# 2 MiB VMEM -> safe under the default scoped limit on v5e/v6e/v7x.
_MAX_TILE_ROWS = 1024


def _make_depth_loss_kernel(n_valid, tile_rows, lanes):
    """n_valid: true (unpadded) element count, known at trace time."""

    def kernel(pred_ref, target_ref, sum_ref, cnt_ref, max_ref, min_ref):
        i = pl.program_id(0)

        @pl.when(i == 0)
        def _init():
            sum_ref[0] = jnp.float32(0.0)
            cnt_ref[0] = jnp.int32(0)
            max_ref[0] = jnp.float32(-jnp.inf)
            min_ref[0] = jnp.float32(jnp.inf)

        # Cast in-kernel (inputs streamed in native dtype).
        pred = pred_ref[...].astype(jnp.float32)
        target = target_ref[...].astype(jnp.float32)

        # Global flat index of every element of this tile -> padding mask.
        row = jax.lax.broadcasted_iota(jnp.int32, (tile_rows, lanes), 0)
        col = jax.lax.broadcasted_iota(jnp.int32, (tile_rows, lanes), 1)
        gidx = (i * tile_rows + row) * lanes + col
        in_bounds = gidx < n_valid

        # Elements used by the masked L1 (valid pixel AND target > 0).
        loss_mask = jnp.logical_and(in_bounds, target > 0.0)
        diff = jnp.abs(pred - target)

        tile_sum = jnp.sum(jnp.where(loss_mask, diff, 0.0))
        tile_cnt = jnp.sum(jnp.where(loss_mask, 1.0, 0.0))  # exact per tile

        sum_ref[0] += tile_sum
        cnt_ref[0] += tile_cnt.astype(jnp.int32)
        # target.max()/min() in the reference are over the whole tensor
        # (not the >0 mask); only exclude padding.
        max_ref[0] = jnp.maximum(
            max_ref[0], jnp.max(jnp.where(in_bounds, target, -jnp.inf)))
        min_ref[0] = jnp.minimum(
            min_ref[0], jnp.min(jnp.where(in_bounds, target, jnp.inf)))

    return kernel


def depth_loss(pred, target, weight=1.0):
    """pred/target: NCHW depth maps of identical shape (any float dtype)."""
    assert pred.shape == target.shape
    n = pred.size
    pred_f = pred.reshape(-1)
    target_f = target.reshape(-1)

    # Pad only when the flat size is not a multiple of the lane width; the
    # in-kernel index mask makes the pad contents irrelevant.
    pad = (-n) % _LANES
    if pad:
        pred_f = jnp.pad(pred_f, (0, pad))
        target_f = jnp.pad(target_f, (0, pad))
    rows = (n + pad) // _LANES

    # Tile choice: full array when small (satisfies the full-dim rule even if
    # rows % 8 != 0); otherwise a fixed 1024-row tile (multiple of 8).
    tile_rows = rows if rows <= _MAX_TILE_ROWS else _MAX_TILE_ROWS
    num_tiles = pl.cdiv(rows, tile_rows)

    pred2d = pred_f.reshape(rows, _LANES)
    target2d = target_f.reshape(rows, _LANES)

    kernel = _make_depth_loss_kernel(n, tile_rows, _LANES)

    scalar_f32 = jax.ShapeDtypeStruct((1,), jnp.float32)
    scalar_i32 = jax.ShapeDtypeStruct((1,), jnp.int32)
    smem_spec = pl.BlockSpec(memory_space=pltpu.SMEM)

    sum_abs, cnt, tmax, tmin = pl.pallas_call(
        kernel,
        out_shape=(scalar_f32, scalar_i32, scalar_f32, scalar_f32),
        grid=(num_tiles,),
        in_specs=[
            pl.BlockSpec((tile_rows, _LANES), lambda i: (i, 0)),
            pl.BlockSpec((tile_rows, _LANES), lambda i: (i, 0)),
        ],
        out_specs=(smem_spec, smem_spec, smem_spec, smem_spec),
        compiler_params=pltpu.CompilerParams(
            dimension_semantics=("arbitrary",)),
    )(pred2d, target2d)

    # mean L1 over masked elements, normalized by target range, scaled by weight.
    l1_mean = sum_abs[0] / cnt[0].astype(jnp.float32)
    return l1_mean / (tmax[0] - tmin[0]) * jnp.float32(weight)


def depth_loss_ref(pred, target, weight=1.0):
    pred = pred.astype(jnp.float32)
    target = target.astype(jnp.float32)
    mask = target > 0
    l1 = jnp.sum(jnp.where(mask, jnp.abs(pred - target), 0.0)) / jnp.sum(mask)
    return l1 / (target.max() - target.min()) * weight


if __name__ == "__main__":
    key = jax.random.PRNGKey(0)

    def make_inputs(k, shape, dtype=jnp.float32):
        k1, k2, k3 = jax.random.split(k, 3)
        pred = jax.random.uniform(k1, shape, jnp.float32, minval=0.1, maxval=5.0)
        raw = jax.random.uniform(k2, shape, jnp.float32, minval=0.5, maxval=6.0)
        holes = jax.random.uniform(k3, shape, jnp.float32) > 0.3
        target = jnp.where(holes, raw, 0.0)   # ~30% invalid (0) pixels
        return pred.astype(dtype), target.astype(dtype)

    k_a, k_b, k_c = jax.random.split(key, 3)

    # (1) Small NCHW depth-map batch -> single-tile path.
    pred, target = make_inputs(k_a, (2, 1, 16, 16))
    out = depth_loss(pred, target, 1.0)
    jax.block_until_ready(out)
    ref = depth_loss_ref(pred, target, 1.0)
    assert jnp.allclose(out, ref, rtol=1e-5, atol=1e-6), (out, ref)

    # (2) Element count not a multiple of 128 -> exercises the pad/index mask.
    pred, target = make_inputs(k_b, (1, 1, 20, 20))
    out = depth_loss(pred, target, 2.5)
    ref = depth_loss_ref(pred, target, 2.5)
    assert jnp.allclose(out, ref, rtol=1e-5, atol=1e-6), (out, ref)

    # (3) Multi-tile grid with a partial last block, bf16 inputs (native-dtype DMA).
    pred, target = make_inputs(k_c, (1, 1, 384, 400), dtype=jnp.bfloat16)
    out = depth_loss(pred, target, 1.0)
    ref = depth_loss_ref(pred, target, 1.0)
    assert jnp.allclose(out, ref, rtol=1e-4, atol=1e-6), (out, ref)

    jax.block_until_ready(out)
    print("KERNEL_OK")
</pallas_src>

<mosaic_0001>
module attributes {stable_mosaic.version = 11 : i64} {
  func.func @kernel(%arg0: i32, %arg1: memref<4x128xf32, #tpu.memory_space<vmem>>, %arg2: memref<4x128xf32, #tpu.memory_space<vmem>>, %arg3: memref<1xf32, #tpu.memory_space<smem>>, %arg4: memref<1xi32, #tpu.memory_space<smem>>, %arg5: memref<1xf32, #tpu.memory_space<smem>>, %arg6: memref<1xf32, #tpu.memory_space<smem>>) attributes {dimension_semantics = [#tpu.dimension_semantics<arbitrary>], iteration_bounds = array<i64: 1>, scalar_prefetch = 0 : i64, scratch_operands = 0 : i64, tpu.core_type = #tpu.core_type<tc>, window_params = [{transform_indices = @transform_0, window_bounds = array<i64: 4, 128>}, {transform_indices = @transform_1, window_bounds = array<i64: 4, 128>}, {transform_indices = @transform_2, window_bounds = array<i64: 1>}, {transform_indices = @transform_3, window_bounds = array<i64: 1>}, {transform_indices = @transform_4, window_bounds = array<i64: 1>}, {transform_indices = @transform_5, window_bounds = array<i64: 1>}]} {
    %c0_i32 = arith.constant 0 : i32
    %0 = arith.cmpi eq, %arg0, %c0_i32 : i32
    %1 = arith.extui %0 : i1 to i32
    %c0_i32_0 = arith.constant 0 : i32
    %2 = arith.cmpi ne, %1, %c0_i32_0 : i32
    scf.if %2 {
      %cst_21 = arith.constant 0.000000e+00 : f32
      %c0_22 = arith.constant 0 : index
      %58 = memref.load %arg3[%c0_22] : memref<1xf32, #tpu.memory_space<smem>>
      memref.store %cst_21, %arg3[%c0_22] : memref<1xf32, #tpu.memory_space<smem>>
      %c0_i32_23 = arith.constant 0 : i32
      %c0_24 = arith.constant 0 : index
      %59 = memref.load %arg4[%c0_24] : memref<1xi32, #tpu.memory_space<smem>>
      memref.store %c0_i32_23, %arg4[%c0_24] : memref<1xi32, #tpu.memory_space<smem>>
      %cst_25 = arith.constant 0xFF800000 : f32
      %c0_26 = arith.constant 0 : index
      %60 = memref.load %arg5[%c0_26] : memref<1xf32, #tpu.memory_space<smem>>
      memref.store %cst_25, %arg5[%c0_26] : memref<1xf32, #tpu.memory_space<smem>>
      %cst_27 = arith.constant 0x7F800000 : f32
      %c0_28 = arith.constant 0 : index
      %61 = memref.load %arg6[%c0_28] : memref<1xf32, #tpu.memory_space<smem>>
      memref.store %cst_27, %arg6[%c0_28] : memref<1xf32, #tpu.memory_space<smem>>
    } else {
    }
    %c0 = arith.constant 0 : index
    %c0_1 = arith.constant 0 : index
    %3 = vector.load %arg1[%c0, %c0_1] : memref<4x128xf32, #tpu.memory_space<vmem>>, vector<4x128xf32>
    %c0_2 = arith.constant 0 : index
    %c0_3 = arith.constant 0 : index
    %4 = vector.load %arg2[%c0_2, %c0_3] : memref<4x128xf32, #tpu.memory_space<vmem>>, vector<4x128xf32>
    %5 = tpu.iota {dimensions = array<i32: 0>} : vector<4x128xi32>
    %6 = tpu.iota {dimensions = array<i32: 1>} : vector<4x128xi32>
    %c4_i32 = arith.constant 4 : i32
    %7 = arith.muli %arg0, %c4_i32 : i32
    %8 = vector.broadcast %7 : i32 to vector<4x128xi32>
    %9 = arith.addi %8, %5 : vector<4x128xi32>
    %c128_i32 = arith.constant 128 : i32
    %10 = vector.broadcast %c128_i32 : i32 to vector<4x128xi32>
    %11 = arith.muli %9, %10 : vector<4x128xi32>
    %12 = arith.addi %11, %6 : vector<4x128xi32>
    %c512_i32 = arith.constant 512 : i32
    %13 = vector.broadcast %c512_i32 : i32 to vector<4x128xi32>
    %14 = arith.cmpi slt, %12, %13 : vector<4x128xi32>
    %cst = arith.constant 0.000000e+00 : f32
    %15 = vector.broadcast %cst : f32 to vector<4x128xf32>
    %16 = arith.cmpf ogt, %4, %15 : vector<4x128xf32>
    %17 = arith.andi %14, %16 : vector<4x128xi1>
    %18 = arith.subf %3, %4 : vector<4x128xf32>
    %19 = math.absf %18 : vector<4x128xf32>
    %cst_4 = arith.constant 0.000000e+00 : f32
    %20 = vector.broadcast %cst_4 : f32 to vector<4x128xf32>
    %21 = arith.select %17, %19, %20 : vector<4x128xi1>, vector<4x128xf32>
    %22 = vector.shape_cast %21 : vector<4x128xf32> to vector<1x4x128xf32>
    %cst_5 = arith.constant dense<0.000000e+00> : vector<1xf32>
    %23 = vector.multi_reduction <add>, %22, %cst_5 [1, 2] : vector<1x4x128xf32> to vector<1xf32>
    %24 = vector.shape_cast %23 : vector<1xf32> to vector<1x1x1xf32>
    %25 = vector.extract %24[0, 0, 0] : f32 from vector<1x1x1xf32>
    %cst_6 = arith.constant 1.000000e+00 : f32
    %cst_7 = arith.constant 0.000000e+00 : f32
    %26 = vector.broadcast %cst_6 : f32 to vector<4x128xf32>
    %27 = vector.broadcast %cst_7 : f32 to vector<4x128xf32>
    %28 = arith.select %17, %26, %27 : vector<4x128xi1>, vector<4x128xf32>
    %29 = vector.shape_cast %28 : vector<4x128xf32> to vector<1x4x128xf32>
    %cst_8 = arith.constant dense<0.000000e+00> : vector<1xf32>
    %30 = vector.multi_reduction <add>, %29, %cst_8 [1, 2] : vector<1x4x128xf32> to vector<1xf32>
    %31 = vector.shape_cast %30 : vector<1xf32> to vector<1x1x1xf32>
    %32 = vector.extract %31[0, 0, 0] : f32 from vector<1x1x1xf32>
    %c0_9 = arith.constant 0 : index
    %33 = memref.load %arg3[%c0_9] : memref<1xf32, #tpu.memory_space<smem>>
    %34 = arith.addf %33, %25 : f32
    %c0_10 = arith.constant 0 : index
    %35 = memref.load %arg3[%c0_10] : memref<1xf32, #tpu.memory_space<smem>>
    memref.store %34, %arg3[%c0_10] : memref<1xf32, #tpu.memory_space<smem>>
    %c0_11 = arith.constant 0 : index
    %36 = memref.load %arg4[%c0_11] : memref<1xi32, #tpu.memory_space<smem>>
    %37 = arith.fptosi %32 : f32 to i32
    %38 = arith.addi %36, %37 : i32
    %c0_12 = arith.constant 0 : index
    %39 = memref.load %arg4[%c0_12] : memref<1xi32, #tpu.memory_space<smem>>
    memref.store %38, %arg4[%c0_12] : memref<1xi32, #tpu.memory_space<smem>>
    %c0_13 = arith.constant 0 : index
    %40 = memref.load %arg5[%c0_13] : memref<1xf32, #tpu.memory_space<smem>>
    %cst_14 = arith.constant 0xFF800000 : f32
    %41 = vector.broadcast %cst_14 : f32 to vector<4x128xf32>
    %42 = arith.select %14, %4, %41 : vector<4x128xi1>, vector<4x128xf32>
    %43 = vector.shape_cast %42 : vector<4x128xf32> to vector<1x4x128xf32>
    %cst_15 = arith.constant dense<0xFF800000> : vector<1xf32>
    %44 = vector.multi_reduction <maximumf>, %43, %cst_15 [1, 2] : vector<1x4x128xf32> to vector<1xf32>
    %45 = vector.shape_cast %44 : vector<1xf32> to vector<1x1x1xf32>
    %46 = vector.extract %45[0, 0, 0] : f32 from vector<1x1x1xf32>
    %47 = arith.maximumf %40, %46 : f32
    %c0_16 = arith.constant 0 : index
    %48 = memref.load %arg5[%c0_16] : memref<1xf32, #tpu.memory_space<smem>>
    memref.store %47, %arg5[%c0_16] : memref<1xf32, #tpu.memory_space<smem>>
    %c0_17 = arith.constant 0 : index
    %49 = memref.load %arg6[%c0_17] : memref<1xf32, #tpu.memory_space<smem>>
    %cst_18 = arith.constant 0x7F800000 : f32
    %50 = vector.broadcast %cst_18 : f32 to vector<4x128xf32>
    %51 = arith.select %14, %4, %50 : vector<4x128xi1>, vector<4x128xf32>
    %52 = vector.shape_cast %51 : vector<4x128xf32> to vector<1x4x128xf32>
    %cst_19 = arith.constant dense<0x7F800000> : vector<1xf32>
    %53 = vector.multi_reduction <minimumf>, %52, %cst_19 [1, 2] : vector<1x4x128xf32> to vector<1xf32>
    %54 = vector.shape_cast %53 : vector<1xf32> to vector<1x1x1xf32>
    %55 = vector.extract %54[0, 0, 0] : f32 from vector<1x1x1xf32>
    %56 = arith.minimumf %49, %55 : f32
    %c0_20 = arith.constant 0 : index
    %57 = memref.load %arg6[%c0_20] : memref<1xf32, #tpu.memory_space<smem>>
    memref.store %56, %arg6[%c0_20] : memref<1xf32, #tpu.memory_space<smem>>
    return
  }
  func.func @transform_0(%arg0: i32) -> (i32, i32) {
    %c0_i32 = arith.constant 0 : i32
    %c0_i32_0 = arith.constant 0 : i32
    return %arg0, %c0_i32 : i32, i32
  }
  func.func @transform_1(%arg0: i32) -> (i32, i32) {
    %c0_i32 = arith.constant 0 : i32
    %c0_i32_0 = arith.constant 0 : i32
    return %arg0, %c0_i32 : i32, i32
  }
  func.func @transform_2(%arg0: i32) -> i32 {
    %c0_i32 = arith.constant 0 : i32
    %c0_i32_0 = arith.constant 0 : i32
    return %c0_i32 : i32
  }
  func.func @transform_3(%arg0: i32) -> i32 {
    %c0_i32 = arith.constant 0 : i32
    %c0_i32_0 = arith.constant 0 : i32
    return %c0_i32 : i32
  }
  func.func @transform_4(%arg0: i32) -> i32 {
    %c0_i32 = arith.constant 0 : i32
    %c0_i32_0 = arith.constant 0 : i32
    return %c0_i32 : i32
  }
  func.func @transform_5(%arg0: i32) -> i32 {
    %c0_i32 = arith.constant 0 : i32
    %c0_i32_0 = arith.constant 0 : i32
    return %c0_i32 : i32
  }
}

</mosaic_0001>

<llo_original>
// kernel: tpu_custom_call.1
$region0: #{tpu_custom_call.1}
  #allocation0 [shape = 'u32[]', space=smem, size = 0x4, offset = 0x4, fixed_abs, tag = 'smem constant byte address 0x4 - core index']
  #allocation1 [shape = 'u32[144,128]{1,0:T(1,128)}', space=vmem, size = 0x12000, scoped, tag = 'internal scratch']
  %s0 = inlined_call_operand.hbm [shape: f32[4,128], index: 0, kind: input, shape index: {}]
  %s1 = inlined_call_operand.hbm [shape: f32[4,128], index: 1, kind: input, shape index: {}]
  %s2 = inlined_call_operand.hbm [shape: f32[1], index: 2, kind: output, shape index: {0}]
  %s3 = inlined_call_operand.hbm [shape: s32[1], index: 3, kind: output, shape index: {1}]
  %s4 = inlined_call_operand.hbm [shape: f32[1], index: 4, kind: output, shape index: {2}]
  %s5 = inlined_call_operand.hbm [shape: f32[1], index: 5, kind: output, shape index: {3}]
  %6 = xla_tuple %s2, %s3, %s4, %s5
  %s7 = sld [smem:[#allocation0]]
  $region54: #{tpu_custom_call.1} parent=0
    _
  %s9 = ssub.s32 1, %s7
  %s10 = scalar_select 0, %s9, %s7
  $region1: #{tpu_custom_call.1} parent=0
    #allocation2 [shape = 'u8[2048]{0}', space=vmem, size = 0x800, scoped, tag = 'input window, operand 0, single buffered']
    #allocation3 [shape = 's32[1]{0}', space=sflag, size = 0x4, scoped, tag = 'scoped memory for tpu_custom_call.1']
    #allocation4 [shape = 's32[1]{0}', space=sflag, size = 0x4, scoped, tag = 'scoped memory for tpu_custom_call.1']
    #allocation5 [shape = 'u8[2048]{0}', space=vmem, size = 0x800, scoped, tag = 'input window, operand 1, single buffered']
    #allocation6 [shape = 's32[1]{0}', space=sflag, size = 0x4, scoped, tag = 'scoped memory for tpu_custom_call.1']
    #allocation7 [shape = 'u8[512]{0}', space=smem, size = 0x200, scoped, tag = 'output window, operand 0, single buffered']
    #allocation8 [shape = 'u8[512]{0}', space=smem, size = 0x200, scoped, tag = 'output window, operand 1, single buffered']
    #allocation9 [shape = 's32[1]{0}', space=sflag, size = 0x4, scoped, tag = 'scoped memory for tpu_custom_call.1']
    #allocation10 [shape = 'u8[512]{0}', space=smem, size = 0x200, scoped, tag = 'output window, operand 2, single buffered']
    #allocation11 [shape = 'u8[512]{0}', space=smem, size = 0x200, scoped, tag = 'output window, operand 3, single buffered']
    #allocation12 [shape = 's32[1]{0}', space=sflag, size = 0x4, scoped, tag = 'scoped memory for tpu_custom_call.1']
    %11 = vsyncpa [#allocation3], 0
    %12 = vsyncpa [#allocation6], 0
    %13 = vsyncpa [#allocation4], 0
    %14 = vsyncpa [#allocation9], 0
    %15 = vsyncpa [#allocation12], 0
    // Predicated region
    $region2: #{tpu_custom_call.1} parent=1 // pred_check
      _
    $region3: #{tpu_custom_call.1} parent=1 // pred_check_branch
      %17 = sbr.rel (0) target = $region5
    $region4: #{tpu_custom_call.1} parent=1 // pred_region
      %s19 = ssub.s32 64, 64
      %20 = vsyncadd [#allocation3], %s19
      %s22 = sshll.u32 [#allocation2], 4
      %s23 = int_to_ptr.vmem [resolvable:$true] %s22
      %25 = dma.hbm_to_vmem [thread:$0]  %s0, 64, %s23, [#allocation3]
    $region5: #{tpu_custom_call.1} parent=1 // pred_fallthru
      _
    // Predicated region
    $region6: #{tpu_custom_call.1} parent=1 // pred_check
      _
    $region7: #{tpu_custom_call.1} parent=1 // pred_check_branch
      %27 = sbr.rel (0) target = $region9
    $region8: #{tpu_custom_call.1} parent=1 // pred_region
      %s29 = ssub.s32 64, 64
      %30 = vsyncadd [#allocation6], %s29
      %s32 = sshll.u32 [#allocation5], 4
      %s33 = int_to_ptr.vmem [resolvable:$true] %s32
      %35 = dma.hbm_to_vmem [thread:$0]  %s1, 64, %s33, [#allocation6]
    $region9: #{tpu_custom_call.1} parent=1 // pred_fallthru
      _
    // Predicated region
    $region10: #{tpu_custom_call.1} parent=1 // pred_check
      _
    $region11: #{tpu_custom_call.1} parent=1 // pred_check_branch
      %37 = sbr.rel (0) target = $region13
    $region12: #{tpu_custom_call.1} parent=1 // pred_region
      %38 = dma.done [#allocation3], 64
    $region13: #{tpu_custom_call.1} parent=1 // pred_fallthru
      _
    // Predicated region
    $region14: #{tpu_custom_call.1} parent=1 // pred_check
      _
    $region15: #{tpu_custom_call.1} parent=1 // pred_check_branch
      %40 = sbr.rel (0) target = $region17
    $region16: #{tpu_custom_call.1} parent=1 // pred_region
      %41 = dma.done [#allocation6], 64
    $region17: #{tpu_custom_call.1} parent=1 // pred_fallthru
      _
    %p42 = scmp.eq.s32.totalorder 0, 0
    // Predicated region
    $region18: #{tpu_custom_call.1} parent=1 // pred_check
      %p43 = pneg %p42
    $region19: #{tpu_custom_call.1} parent=1 // pred_check_branch
      %45 = sbr.rel (%p43) target = $region21
    $region20: #{tpu_custom_call.1} parent=1 // pred_region
      %s46 = scalar_lea.smem [#allocation7], 0
      %47 = sst [smem:[%s46]] 0.0
      %s48 = scalar_lea.smem [#allocation8], 0
      %49 = sst [smem:[%s48]] 0
      %s50 = scalar_lea.smem [#allocation10], 0
      %51 = sst [smem:[%s50]] -inf
      %s52 = scalar_lea.smem [#allocation11], 0
      %53 = sst [smem:[%s52]] inf
    $region21: #{tpu_custom_call.1} parent=1 // pred_fallthru
      _
    %v54 = vld [vmem:[#allocation2] sm:$0xf]
    %v55 = vld [vmem:[#allocation5] sm:$0xf]
    %v56 = vlaneseq
    %v57 = vshrl.u32 %v56, 7
    %v58 = vlaneseq
    %v59 = vand.u32 %v58, 127
    %s60 = smul.u32 0, 4
    %v61 = vstv %s60
    %v62 = vadd.s32 %v61, %v57
    %v63 = vmul.u32 %v62, 128
    %v64 = vadd.s32 %v63, %v59
    %vm65 = vcmp.lt.s32.totalorder %v64, 512
    %vm66 = vcmp.gt.f32.partialorder %v55, 0.0
    %vm67 = vmand %vm65, %vm66
    %v68 = vsub.f32 %v54, %v55
    %v69 = vand.u32 2147483647, %v68
    %v70 = vsel %vm67, %v69, 0.0
    %vm71 = vcmask 1043456
    %v72 = vsel %vm71, %v70, 0.0
    %73 = vadd.xlane.f32.xlu0 %v72
    %v74 = vpop.xlane.xlu0 %73
    %v75 = vrot.slane %v74, 4
    %v76 = vadd.f32 %v74, %v75
    %v77 = vrot.slane %v76, 2
    %v78 = vadd.f32 %v76, %v77
    %v79 = vrot.slane %v78, 1
    %v80 = vadd.f32 %v78, %v79
    %s81 = vtos %v80
    %v82 = vsel %vm67, 1.0, 0.0
    %v83 = vsel %vm71, %v82, 0.0
    %84 = vadd.xlane.f32.xlu0 %v83
    %v85 = vpop.xlane.xlu0 %84
    %v86 = vrot.slane %v85, 4
    %v87 = vadd.f32 %v85, %v86
    %v88 = vrot.slane %v87, 2
    %v89 = vadd.f32 %v87, %v88
    %v90 = vrot.slane %v89, 1
    %v91 = vadd.f32 %v89, %v90
    %s92 = vtos %v91
    %s93 = sld [smem:[#allocation7]]
    %s94 = sadd.f32 %s93, %s81
    %s95 = scalar_lea.smem [#allocation7], 0
    %96 = sst [smem:[%s95]] %s94
    %s97 = sld [smem:[#allocation8]]
    %s98 = scvt.f32.s32.to.zero.pseudo %s92
    %s99 = sadd.s32 %s97, %s98
    %s100 = scalar_lea.smem [#allocation8], 0
    %101 = sst [smem:[%s100]] %s99
    %s102 = sld [smem:[#allocation10]]
    %v103 = vsel %vm65, %v55, -inf
    %v104 = vsel %vm71, %v103, -inf
    %105 = vmax.xlane.f32.xlu0 %v104
    %v106 = vpop.xlane.xlu0 %105
    %v107 = vrot.slane %v106, 4
    %v108 = vmax.f32 %v106, %v107
    %v109 = vrot.slane %v108, 2
    %v110 = vmax.f32 %v108, %v109
    %v111 = vrot.slane %v110, 1
    %v112 = vmax.f32 %v110, %v111
    %s113 = vtos %v112
    %s114 = smax.f32 %s102, %s113
    %s115 = scalar_lea.smem [#allocation10], 0
    %116 = sst [smem:[%s115]] %s114
    %s117 = sld [smem:[#allocation11]]
    %v118 = vsel %vm65, %v55, inf
    %v119 = vsel %vm71, %v118, inf
    %120 = vmin.xlane.f32.xlu0 %v119
    %v121 = vpop.xlane.xlu0 %120
    %v122 = vrot.slane %v121, 4
    %v123 = vmin.f32 %v121, %v122
    %v124 = vrot.slane %v123, 2
    %v125 = vmin.f32 %v123, %v124
    %v126 = vrot.slane %v125, 1
    %v127 = vmin.f32 %v125, %v126
    %s128 = vtos %v127
    %s129 = smin.f32 %s117, %s128
    %s130 = scalar_lea.smem [#allocation11], 0
    %131 = sst [smem:[%s130]] %s129
    // Predicated region
    $region22: #{tpu_custom_call.1} parent=1 // pred_check
      _
    $region23: #{tpu_custom_call.1} parent=1 // pred_check_branch
      %133 = sbr.rel (0) target = $region25
    $region24: #{tpu_custom_call.1} parent=1 // pred_region
      %s135 = ssub.s32 16, 16
      %136 = vsyncadd [#allocation4], %s135
      %139 = dma.smem_to_hbm [#allocation7], 16, %s2, [#allocation4]
    $region25: #{tpu_custom_call.1} parent=1 // pred_fallthru
      _
    // Predicated region
    $region26: #{tpu_custom_call.1} parent=1 // pred_check
      _
    $region27: #{tpu_custom_call.1} parent=1 // pred_check_branch
      %141 = sbr.rel (0) target = $region29
    $region28: #{tpu_custom_call.1} parent=1 // pred_region
      %s143 = ssub.s32 16, 16
      %144 = vsyncadd [#allocation9], %s143
      %147 = dma.smem_to_hbm [#allocation8], 16, %s3, [#allocation9]
    $region29: #{tpu_custom_call.1} parent=1 // pred_fallthru
      _
    // Predicated region
    $region30: #{tpu_custom_call.1} parent=1 // pred_check
      _
    $region31: #{tpu_custom_call.1} parent=1 // pred_check_branch
      %149 = sbr.rel (0) target = $region33
    $region32: #{tpu_custom_call.1} parent=1 // pred_region
      %s151 = ssub.s32 16, 16
      %152 = vsyncadd [#allocation9], %s151
      %155 = dma.smem_to_hbm [#allocation10], 16, %s4, [#allocation9]
    $region33: #{tpu_custom_call.1} parent=1 // pred_fallthru
      _
    // Predicated region
    $region34: #{tpu_custom_call.1} parent=1 // pred_check
      _
    $region35: #{tpu_custom_call.1} parent=1 // pred_check_branch
      %157 = sbr.rel (0) target = $region37
    $region36: #{tpu_custom_call.1} parent=1 // pred_region
      %s159 = ssub.s32 16, 16
      %160 = vsyncadd [#allocation12], %s159
      %163 = dma.smem_to_hbm [#allocation11], 16, %s5, [#allocation12]
    $region37: #{tpu_custom_call.1} parent=1 // pred_fallthru
      _
    // Predicated region
    $region38: #{tpu_custom_call.1} parent=1 // pred_check
      _
    $region39: #{tpu_custom_call.1} parent=1 // pred_check_branch
      %165 = sbr.rel (0) target = $region41
    $region40: #{tpu_custom_call.1} parent=1 // pred_region
      %166 = dma.done [#allocation4], 16
    $region41: #{tpu_custom_call.1} parent=1 // pred_fallthru
      _
    // Predicated region
    $region42: #{tpu_custom_call.1} parent=1 // pred_check
      _
    $region43: #{tpu_custom_call.1} parent=1 // pred_check_branch
      %168 = sbr.rel (0) target = $region45
    $region44: #{tpu_custom_call.1} parent=1 // pred_region
      %169 = dma.done [#allocation9], 16
    $region45: #{tpu_custom_call.1} parent=1 // pred_fallthru
      _
    // Predicated region
    $region46: #{tpu_custom_call.1} parent=1 // pred_check
      _
    $region47: #{tpu_custom_call.1} parent=1 // pred_check_branch
      %171 = sbr.rel (0) target = $region49
    $region48: #{tpu_custom_call.1} parent=1 // pred_region
      %172 = dma.done [#allocation9], 16
    $region49: #{tpu_custom_call.1} parent=1 // pred_fallthru
      _
    // Predicated region
    $region50: #{tpu_custom_call.1} parent=1 // pred_check
      _
    $region51: #{tpu_custom_call.1} parent=1 // pred_check_branch
      %174 = sbr.rel (0) target = $region53
    $region52: #{tpu_custom_call.1} parent=1 // pred_region
      %175 = dma.done [#allocation12], 16
    $region53: #{tpu_custom_call.1} parent=1 // pred_fallthru
      _
    %176 = sfence
    %177 = vsyncpa [#allocation3], 1
    %178 = vsyncpa [#allocation6], 1
    %179 = vsyncpa [#allocation4], 1
    %180 = vsyncpa [#allocation9], 1
    %181 = vsyncpa [#allocation12], 1

</llo_original>
